<compile_context>
chip_gen: v5e
topology: v5e:2x2
jax: 0.10.0
libtpu: 0.0.40
codegen_flags: <defaults>
</compile_context>

<pallas_src>
import functools

import jax
import jax.numpy as jnp
from jax.experimental import pallas as pl
from jax.experimental.pallas import tpu as pltpu

_LANE = 128
_SUBLANE = 8


def _round_up(x, m):
    return ((x + m - 1) // m) * m


def _fused_mlp_kernel(*refs, num_layers, relu_flags):
    """Fused MLP: h = x; h = [ReLU](h @ W_i + b_i) for each layer; store h."""
    x_ref = refs[0]
    o_ref = refs[-1]
    wb_refs = refs[1:-1]  # (w_0, b_0, w_1, b_1, ...)

    h = x_ref[...]
    for li in range(num_layers):
        w = wb_refs[2 * li][...]
        b = wb_refs[2 * li + 1][...]          # (1, Fout_pad), f32
        # MXU matmul with f32 accumulation (inputs may be bf16).
        y = jnp.dot(h.astype(w.dtype), w, preferred_element_type=jnp.float32)
        y = y + b                              # bias once per layer, f32 epilogue
        if relu_flags[li]:
            y = jnp.maximum(y, 0.0)
        h = y
    o_ref[...] = h.astype(o_ref.dtype)


def linear_layer_forward(x, params, relu_final=True, *,
                         compute_dtype=jnp.float32, tile_b=None):
    """Sequential MLP forward matching LinearLayer(feat_dims, relu_final).

    x: (B, Fin) f32.  params: list of (W (Fin,Fout), b (1,Fout)) f32.
    compute_dtype: dtype fed to the MXU (f32, or bf16 on v6e/v7x); accumulation
    and the bias/ReLU epilogue stay in f32.
    """
    B, Fin = x.shape
    n = len(params)
    assert n >= 1
    dims = [Fin] + [w.shape[1] for (w, _) in params]
    dims_p = [_round_up(d, _LANE) for d in dims]          # lane-dense feature dims

    if tile_b is None:
        tile_b = 128 if B >= 128 else _round_up(max(B, 1), _SUBLANE)
    B_pad = _round_up(B, tile_b)

    # Zero padding keeps the math exact: padded input columns are 0 and padded
    # weight rows/cols + padded bias are 0, so padded lanes stay 0 through ReLU.
    x_p = jnp.zeros((B_pad, dims_p[0]), compute_dtype).at[:B, :Fin].set(
        x.astype(compute_dtype))
    flat_wb = []
    for li, (w, b) in enumerate(params):
        w_p = jnp.zeros((dims_p[li], dims_p[li + 1]), compute_dtype)
        w_p = w_p.at[:dims[li], :dims[li + 1]].set(w.astype(compute_dtype))
        b_p = jnp.zeros((1, dims_p[li + 1]), jnp.float32)
        b_p = b_p.at[:, :dims[li + 1]].set(b.astype(jnp.float32))
        flat_wb += [w_p, b_p]

    relu_flags = tuple((li < n - 1) or relu_final for li in range(n))

    # VMEM budget (weights double-buffered worst-case + activations + x/out
    # double buffers).  Sized against v7x's 64 MiB physical / 32 MiB scoped VMEM.
    itemsize = jnp.dtype(compute_dtype).itemsize
    w_bytes = sum(dims_p[li] * dims_p[li + 1] * itemsize + dims_p[li + 1] * 4
                  for li in range(n))
    act_bytes = sum(tile_b * d * 4 for d in dims_p)
    io_bytes = 2 * tile_b * (dims_p[0] * itemsize + dims_p[-1] * 4)
    est = 2 * w_bytes + act_bytes + io_bytes
    if est > (40 << 20):
        # TODO(synk): very large feat_dims need an (M,N,K)-tiled per-layer kernel
        # instead of keeping all weights VMEM-resident.
        raise NotImplementedError("feat_dims too large for VMEM-resident fused MLP")
    vmem_limit = int(min(max(2 * est + (4 << 20), 32 << 20), 48 << 20))

    grid = (B_pad // tile_b,)
    in_specs = [pl.BlockSpec((tile_b, dims_p[0]), lambda bi: (bi, 0))]
    for li in range(n):
        # Whole (padded) weight/bias as one block with a constant index_map:
        # fetched once, kept resident in VMEM across all batch tiles.
        in_specs.append(pl.BlockSpec((dims_p[li], dims_p[li + 1]), lambda bi: (0, 0)))
        in_specs.append(pl.BlockSpec((1, dims_p[li + 1]), lambda bi: (0, 0)))
    out_specs = pl.BlockSpec((tile_b, dims_p[-1]), lambda bi: (bi, 0))

    out_p = pl.pallas_call(
        functools.partial(_fused_mlp_kernel, num_layers=n, relu_flags=relu_flags),
        out_shape=jax.ShapeDtypeStruct((B_pad, dims_p[-1]), jnp.float32),
        grid=grid,
        in_specs=in_specs,
        out_specs=out_specs,
        compiler_params=pltpu.CompilerParams(
            dimension_semantics=("parallel",),       # batch tiles shard across TCs (v7x)
            vmem_limit_bytes=vmem_limit),
    )(x_p, *flat_wb)

    return out_p[:B, :dims[-1]]


def init_linear_layer_params(key, feat_dims):
    """Deterministic init mimicking PyTorch nn.Linear defaults:
    W, b ~ U(-1/sqrt(fan_in), 1/sqrt(fan_in)).  W stored as (F_in, F_out)."""
    params = []
    for i in range(len(feat_dims) - 1):
        fan_in, fan_out = feat_dims[i], feat_dims[i + 1]
        key, kw, kb = jax.random.split(key, 3)
        bound = 1.0 / jnp.sqrt(jnp.float32(fan_in))
        w = jax.random.uniform(kw, (fan_in, fan_out), jnp.float32, -bound, bound)
        b = jax.random.uniform(kb, (1, fan_out), jnp.float32, -bound, bound)
        params.append((w, b))
    return params


def _reference_forward(x, params, relu_final=True):
    n = len(params)
    out = x
    for i, (w, b) in enumerate(params):
        out = out @ w + b
        if (i < n - 1) or (i == n - 1 and relu_final):
            out = jnp.maximum(out, 0.0)
    return out


if __name__ == "__main__":
    key = jax.random.PRNGKey(0)
    feat_dims = [32, 64, 16]      # LinearLayer([32, 64, 16], relu_final=True)
    batch = 8

    kx, kp = jax.random.split(key)
    x = jax.random.normal(kx, (batch, feat_dims[0]), dtype=jnp.float32)
    params = init_linear_layer_params(kp, feat_dims)
    ref = _reference_forward(x, params, relu_final=True)

    # f32 compute path — exact match vs reference.
    out = jax.block_until_ready(linear_layer_forward(x, params, relu_final=True))
    assert out.shape == (batch, feat_dims[-1])
    assert jnp.allclose(out, ref, atol=1e-5, rtol=1e-5)

    # relu_final=False path.
    out_nr = jax.block_until_ready(linear_layer_forward(x, params, relu_final=False))
    ref_nr = _reference_forward(x, params, relu_final=False)
    assert jnp.allclose(out_nr, ref_nr, atol=1e-5, rtol=1e-5)

    # bf16 compute path (recommended on v6e/v7x): bf16 MXU inputs, f32 accumulate.
    out_bf16 = jax.block_until_ready(
        linear_layer_forward(x, params, relu_final=True, compute_dtype=jnp.bfloat16))
    assert jnp.allclose(out_bf16, ref, atol=1e-1, rtol=1e-1)

    print("KERNEL_OK")
</pallas_src>

<mosaic_0001>
module attributes {stable_mosaic.version = 11 : i64} {
  func.func @_fused_mlp_kernel(%arg0: i32, %arg1: memref<8x128xf32, #tpu.memory_space<vmem>>, %arg2: memref<128x128xf32, #tpu.memory_space<vmem>>, %arg3: memref<1x128xf32, #tpu.memory_space<vmem>>, %arg4: memref<128x128xf32, #tpu.memory_space<vmem>>, %arg5: memref<1x128xf32, #tpu.memory_space<vmem>>, %arg6: memref<8x128xf32, #tpu.memory_space<vmem>>) attributes {dimension_semantics = [#tpu.dimension_semantics<parallel>], iteration_bounds = array<i64: 1>, scalar_prefetch = 0 : i64, scratch_operands = 0 : i64, tpu.core_type = #tpu.core_type<tc>, window_params = [{transform_indices = @transform_0, window_bounds = array<i64: 8, 128>}, {pipeline_mode = #tpu.pipeline_mode<synchronous>, transform_indices = @transform_1, window_bounds = array<i64: 128, 128>}, {pipeline_mode = #tpu.pipeline_mode<synchronous>, transform_indices = @transform_2, window_bounds = array<i64: 1, 128>}, {pipeline_mode = #tpu.pipeline_mode<synchronous>, transform_indices = @transform_3, window_bounds = array<i64: 128, 128>}, {pipeline_mode = #tpu.pipeline_mode<synchronous>, transform_indices = @transform_4, window_bounds = array<i64: 1, 128>}, {transform_indices = @transform_5, window_bounds = array<i64: 8, 128>}]} {
    %c0 = arith.constant 0 : index
    %c0_0 = arith.constant 0 : index
    %0 = vector.load %arg1[%c0, %c0_0] : memref<8x128xf32, #tpu.memory_space<vmem>>, vector<8x128xf32>
    %c0_1 = arith.constant 0 : index
    %c0_2 = arith.constant 0 : index
    %1 = vector.load %arg2[%c0_1, %c0_2] : memref<128x128xf32, #tpu.memory_space<vmem>>, vector<128x128xf32>
    %c0_3 = arith.constant 0 : index
    %c0_4 = arith.constant 0 : index
    %2 = vector.load %arg3[%c0_3, %c0_4] : memref<1x128xf32, #tpu.memory_space<vmem>>, vector<1x128xf32>
    %cst = arith.constant dense<0.000000e+00> : vector<8x128xf32>
    %3 = tpu.matmul %0, %1, %cst {dimension_numbers = #tpu.dot_dimension_numbers<[1], [0], [0], [1], [0, 0, 1, 1], [], []>} : vector<8x128xf32>, vector<128x128xf32>, vector<8x128xf32> -> vector<8x128xf32>
    %4 = vector.broadcast %2 : vector<1x128xf32> to vector<8x128xf32>
    %5 = arith.addf %3, %4 : vector<8x128xf32>
    %cst_5 = arith.constant 0.000000e+00 : f32
    %6 = vector.broadcast %cst_5 : f32 to vector<8x128xf32>
    %7 = arith.maximumf %5, %6 : vector<8x128xf32>
    %c0_6 = arith.constant 0 : index
    %c0_7 = arith.constant 0 : index
    %8 = vector.load %arg4[%c0_6, %c0_7] : memref<128x128xf32, #tpu.memory_space<vmem>>, vector<128x128xf32>
    %c0_8 = arith.constant 0 : index
    %c0_9 = arith.constant 0 : index
    %9 = vector.load %arg5[%c0_8, %c0_9] : memref<1x128xf32, #tpu.memory_space<vmem>>, vector<1x128xf32>
    %cst_10 = arith.constant dense<0.000000e+00> : vector<8x128xf32>
    %10 = tpu.matmul %7, %8, %cst_10 {dimension_numbers = #tpu.dot_dimension_numbers<[1], [0], [0], [1], [0, 0, 1, 1], [], []>} : vector<8x128xf32>, vector<128x128xf32>, vector<8x128xf32> -> vector<8x128xf32>
    %11 = vector.broadcast %9 : vector<1x128xf32> to vector<8x128xf32>
    %12 = arith.addf %10, %11 : vector<8x128xf32>
    %cst_11 = arith.constant 0.000000e+00 : f32
    %13 = vector.broadcast %cst_11 : f32 to vector<8x128xf32>
    %14 = arith.maximumf %12, %13 : vector<8x128xf32>
    %c0_12 = arith.constant 0 : index
    %c0_13 = arith.constant 0 : index
    %15 = vector.load %arg6[%c0_12, %c0_13] : memref<8x128xf32, #tpu.memory_space<vmem>>, vector<8x128xf32>
    tpu.vector_store %arg6[%c0_12, %c0_13], %14 {strides = array<i32>} : memref<8x128xf32, #tpu.memory_space<vmem>>, vector<8x128xf32>,
    return
  }
  func.func @transform_0(%arg0: i32) -> (i32, i32) {
    %c0_i32 = arith.constant 0 : i32
    %c0_i32_0 = arith.constant 0 : i32
    return %arg0, %c0_i32 : i32, i32
  }
  func.func @transform_1(%arg0: i32) -> (i32, i32) {
    %c0_i32 = arith.constant 0 : i32
    %c0_i32_0 = arith.constant 0 : i32
    %c0_i32_1 = arith.constant 0 : i32
    return %c0_i32, %c0_i32_0 : i32, i32
  }
  func.func @transform_2(%arg0: i32) -> (i32, i32) {
    %c0_i32 = arith.constant 0 : i32
    %c0_i32_0 = arith.constant 0 : i32
    %c0_i32_1 = arith.constant 0 : i32
    return %c0_i32, %c0_i32_0 : i32, i32
  }
  func.func @transform_3(%arg0: i32) -> (i32, i32) {
    %c0_i32 = arith.constant 0 : i32
    %c0_i32_0 = arith.constant 0 : i32
    %c0_i32_1 = arith.constant 0 : i32
    return %c0_i32, %c0_i32_0 : i32, i32
  }
  func.func @transform_4(%arg0: i32) -> (i32, i32) {
    %c0_i32 = arith.constant 0 : i32
    %c0_i32_0 = arith.constant 0 : i32
    %c0_i32_1 = arith.constant 0 : i32
    return %c0_i32, %c0_i32_0 : i32, i32
  }
  func.func @transform_5(%arg0: i32) -> (i32, i32) {
    %c0_i32 = arith.constant 0 : i32
    %c0_i32_0 = arith.constant 0 : i32
    return %arg0, %c0_i32 : i32, i32
  }
}

</mosaic_0001>

<llo_original>
// kernel: tpu_custom_call.1
$region0: #{tpu_custom_call.1}
  #allocation0 [shape = 'u32[]', space=smem, size = 0x4, offset = 0x4, fixed_abs, tag = 'smem constant byte address 0x4 - core index']
  #allocation1 [shape = 'u32[72,128]{1,0:T(1,128)}', space=vmem, size = 0x9000, scoped, tag = 'internal scratch']
  %s0 = inlined_call_operand.hbm [shape: f32[8,128], index: 0, kind: input, shape index: {}]
  %s1 = inlined_call_operand.hbm [shape: f32[128,128], index: 1, kind: input, shape index: {}]
  %s2 = inlined_call_operand.vmem [shape: f32[1,128], index: 2, kind: input, shape index: {}]
  %s3 = inlined_call_operand.hbm [shape: f32[128,128], index: 3, kind: input, shape index: {}]
  %s4 = inlined_call_operand.vmem [shape: f32[1,128], index: 4, kind: input, shape index: {}]
  %s5 = inlined_call_operand.hbm [shape: f32[8,128], index: 5, kind: output, shape index: {}]
  %s6 = sld [smem:[#allocation0]]
  $region42: #{tpu_custom_call.1} parent=0
    _
  %s8 = ssub.s32 1, %s6
  %s9 = scalar_select 0, %s8, %s6
  $region1: #{tpu_custom_call.1} parent=0
    #allocation2 [shape = 'u8[4096]{0}', space=vmem, size = 0x1000, scoped, tag = 'input window, operand 0, single buffered']
    #allocation3 [shape = 's32[1]{0}', space=sflag, size = 0x4, scoped, tag = 'scoped memory for tpu_custom_call.1']
    #allocation4 [shape = 's32[1]{0}', space=sflag, size = 0x4, scoped, tag = 'scoped memory for tpu_custom_call.1']
    #allocation5 [shape = 'u8[65536]{0}', space=vmem, size = 0x10000, scoped, tag = 'input window, operand 1, single buffered']
    #allocation6 [shape = 's32[1]{0}', space=sflag, size = 0x4, scoped, tag = 'scoped memory for tpu_custom_call.1']
    #allocation7 [shape = 'u8[65536]{0}', space=vmem, size = 0x10000, scoped, tag = 'input window, operand 3, single buffered']
    #allocation8 [shape = 'u8[4096]{0}', space=vmem, size = 0x1000, scoped, tag = 'output window, operand 0, single buffered']
    %10 = vsyncpa [#allocation3], 0
    %11 = vsyncpa [#allocation6], 0
    %12 = vsyncpa [#allocation4], 0
    // Predicated region
    $region2: #{tpu_custom_call.1} parent=1 // pred_check
      _
    $region3: #{tpu_custom_call.1} parent=1 // pred_check_branch
      %14 = sbr.rel (0) target = $region5
    $region4: #{tpu_custom_call.1} parent=1 // pred_region
      %16 = vsyncadd [#allocation3], 0
      %s18 = sshll.u32 %s0, 4
      %s19 = int_to_ptr.hbm [resolvable:$true] %s18
      %s20 = sshll.u32 [#allocation2], 4
      %s21 = int_to_ptr.vmem [resolvable:$true] %s20
      %23 = dma.hbm_to_vmem [thread:$0]  %s19, 128, %s21, [#allocation3]
    $region5: #{tpu_custom_call.1} parent=1 // pred_fallthru
      _
    // Predicated region
    $region6: #{tpu_custom_call.1} parent=1 // pred_check
      _
    $region7: #{tpu_custom_call.1} parent=1 // pred_check_branch
      %25 = sbr.rel (0) target = $region9
    $region8: #{tpu_custom_call.1} parent=1 // pred_region
      %27 = vsyncadd [#allocation6], 0
      %s28 = sshll.u32 %s1, 4
      %s29 = int_to_ptr.hbm [resolvable:$true] %s28
      %s30 = sshll.u32 [#allocation5], 4
      %s31 = int_to_ptr.vmem [resolvable:$true] %s30
      %36 = dma.hbm_to_vmem [thread:$0]  %s29, 2048, %s31, [#allocation6], 128, 128, 8
    $region9: #{tpu_custom_call.1} parent=1 // pred_fallthru
      _
    // Predicated region
    $region10: #{tpu_custom_call.1} parent=1 // pred_check
      _
    $region11: #{tpu_custom_call.1} parent=1 // pred_check_branch
      %38 = sbr.rel (0) target = $region13
    $region12: #{tpu_custom_call.1} parent=1 // pred_region
      _
    $region13: #{tpu_custom_call.1} parent=1 // pred_fallthru
      _
    // Predicated region
    $region14: #{tpu_custom_call.1} parent=1 // pred_check
      _
    $region15: #{tpu_custom_call.1} parent=1 // pred_check_branch
      %40 = sbr.rel (0) target = $region17
    $region16: #{tpu_custom_call.1} parent=1 // pred_region
      %42 = vsyncadd [#allocation6], 0
      %s43 = sshll.u32 %s3, 4
      %s44 = int_to_ptr.hbm [resolvable:$true] %s43
      %s45 = sshll.u32 [#allocation7], 4
      %s46 = int_to_ptr.vmem [resolvable:$true] %s45
      %51 = dma.hbm_to_vmem [thread:$0]  %s44, 2048, %s46, [#allocation6], 128, 128, 8
    $region17: #{tpu_custom_call.1} parent=1 // pred_fallthru
      _
    // Predicated region
    $region18: #{tpu_custom_call.1} parent=1 // pred_check
      _
    $region19: #{tpu_custom_call.1} parent=1 // pred_check_branch
      %53 = sbr.rel (0) target = $region21
    $region20: #{tpu_custom_call.1} parent=1 // pred_region
      _
    $region21: #{tpu_custom_call.1} parent=1 // pred_fallthru
      _
    // Predicated region
    $region22: #{tpu_custom_call.1} parent=1 // pred_check
      _
    $region23: #{tpu_custom_call.1} parent=1 // pred_check_branch
      %55 = sbr.rel (0) target = $region25
    $region24: #{tpu_custom_call.1} parent=1 // pred_region
      %57 = dma.done [#allocation3], 128
    $region25: #{tpu_custom_call.1} parent=1 // pred_fallthru
      _
    // Predicated region
    $region26: #{tpu_custom_call.1} parent=1 // pred_check
      _
    $region27: #{tpu_custom_call.1} parent=1 // pred_check_branch
      %59 = sbr.rel (0) target = $region29
    $region28: #{tpu_custom_call.1} parent=1 // pred_region
      %61 = dma.done [#allocation6], 2048
    $region29: #{tpu_custom_call.1} parent=1 // pred_fallthru
      _
    // Predicated region
    $region30: #{tpu_custom_call.1} parent=1 // pred_check
      _
    $region31: #{tpu_custom_call.1} parent=1 // pred_check_branch
      %63 = sbr.rel (0) target = $region33
    $region32: #{tpu_custom_call.1} parent=1 // pred_region
      %65 = dma.done [#allocation6], 2048
    $region33: #{tpu_custom_call.1} parent=1 // pred_fallthru
      _
    %v66 = vld [vmem:[#allocation2] sm:$0xff]
    %v67 = vld [vmem:[#allocation5] sm:$0xff]
    %v68 = vld [vmem:[#allocation5 + $0x8] sm:$0xff]
    %v69 = vld [vmem:[#allocation5 + $0x10] sm:$0xff]
    %v70 = vld [vmem:[#allocation5 + $0x18] sm:$0xff]
    %v71 = vld [vmem:[#allocation5 + $0x20] sm:$0xff]
    %v72 = vld [vmem:[#allocation5 + $0x28] sm:$0xff]
    %v73 = vld [vmem:[#allocation5 + $0x30] sm:$0xff]
    %v74 = vld [vmem:[#allocation5 + $0x38] sm:$0xff]
    %v75 = vld [vmem:[#allocation5 + $0x40] sm:$0xff]
    %v76 = vld [vmem:[#allocation5 + $0x48] sm:$0xff]
    %v77 = vld [vmem:[#allocation5 + $0x50] sm:$0xff]
    %v78 = vld [vmem:[#allocation5 + $0x58] sm:$0xff]
    %v79 = vld [vmem:[#allocation5 + $0x60] sm:$0xff]
    %v80 = vld [vmem:[#allocation5 + $0x68] sm:$0xff]
    %v81 = vld [vmem:[#allocation5 + $0x70] sm:$0xff]
    %v82 = vld [vmem:[#allocation5 + $0x78] sm:$0xff]
    %v83 = vld [vmem:[%s2] sm:$0x1]
    %v85 = vperm.slane %v83, 0
    %87 = vmatpush.msra.mxu0 %v82
    %88 = vmatpush.msra.mxu0 %v81
    %89 = vmatpush.msra.mxu0 %v80
    %90 = vmatpush.msra.mxu0 %v79
    %91 = vmatpush.msra.mxu0 %v78
    %92 = vmatpush.msra.mxu0 %v77
    %93 = vmatpush.msra.mxu0 %v76
    %94 = vmatpush.msra.mxu0 %v75
    %95 = vmatpush.msra.mxu0 %v74
    %96 = vmatpush.msra.mxu0 %v73
    %97 = vmatpush.msra.mxu0 %v72
    %98 = vmatpush.msra.mxu0 %v71
    %99 = vmatpush.msra.mxu0 %v70
    %100 = vmatpush.msra.mxu0 %v69
    %101 = vmatpush.msra.mxu0 %v68
    %102 = vmatpush.msra.mxu0 %v67
    %103 = vmatmul.f32.gmra.mxu0 %v66
    %v104 = vpop.f32.mrf.mxu0
    %v105 = vadd.f32 %v85, %v104
    %106 = vdwg.mxu0
    %v107 = vmax.f32 %v105, 0.0
    %v108 = vld [vmem:[#allocation7] sm:$0xff]
    %v109 = vld [vmem:[#allocation7 + $0x8] sm:$0xff]
    %v110 = vld [vmem:[#allocation7 + $0x10] sm:$0xff]
    %v111 = vld [vmem:[#allocation7 + $0x18] sm:$0xff]
    %v112 = vld [vmem:[#allocation7 + $0x20] sm:$0xff]
    %v113 = vld [vmem:[#allocation7 + $0x28] sm:$0xff]
    %v114 = vld [vmem:[#allocation7 + $0x30] sm:$0xff]
    %v115 = vld [vmem:[#allocation7 + $0x38] sm:$0xff]
    %v116 = vld [vmem:[#allocation7 + $0x40] sm:$0xff]
    %v117 = vld [vmem:[#allocation7 + $0x48] sm:$0xff]
    %v118 = vld [vmem:[#allocation7 + $0x50] sm:$0xff]
    %v119 = vld [vmem:[#allocation7 + $0x58] sm:$0xff]
    %v120 = vld [vmem:[#allocation7 + $0x60] sm:$0xff]
    %v121 = vld [vmem:[#allocation7 + $0x68] sm:$0xff]
    %v122 = vld [vmem:[#allocation7 + $0x70] sm:$0xff]
    %v123 = vld [vmem:[#allocation7 + $0x78] sm:$0xff]
    %v124 = vld [vmem:[%s4] sm:$0x1]
    %v126 = vperm.slane %v124, 0
    %128 = vmatpush.msra.mxu0 %v123
    %129 = vmatpush.msra.mxu0 %v122
    %130 = vmatpush.msra.mxu0 %v121
    %131 = vmatpush.msra.mxu0 %v120
    %132 = vmatpush.msra.mxu0 %v119
    %133 = vmatpush.msra.mxu0 %v118
    %134 = vmatpush.msra.mxu0 %v117
    %135 = vmatpush.msra.mxu0 %v116
    %136 = vmatpush.msra.mxu0 %v115
    %137 = vmatpush.msra.mxu0 %v114
    %138 = vmatpush.msra.mxu0 %v113
    %139 = vmatpush.msra.mxu0 %v112
    %140 = vmatpush.msra.mxu0 %v111
    %141 = vmatpush.msra.mxu0 %v110
    %142 = vmatpush.msra.mxu0 %v109
    %143 = vmatpush.msra.mxu0 %v108
    %144 = vmatmul.f32.gmra.mxu0 %v107
    %v145 = vpop.f32.mrf.mxu0
    %v146 = vadd.f32 %v126, %v145
    %147 = vdwg.mxu0
    %v148 = vmax.f32 %v146, 0.0
    %149 = vst [vmem:[#allocation8] sm:$0xff] %v148
    // Predicated region
    $region34: #{tpu_custom_call.1} parent=1 // pred_check
      _
    $region35: #{tpu_custom_call.1} parent=1 // pred_check_branch
      %151 = sbr.rel (0) target = $region37
    $region36: #{tpu_custom_call.1} parent=1 // pred_region
      %153 = vsyncadd [#allocation4], 0
      %s155 = sshll.u32 [#allocation8], 4
      %s156 = int_to_ptr.vmem [resolvable:$true] %s155
      %s157 = sshll.u32 %s5, 4
      %s158 = int_to_ptr.hbm [resolvable:$true] %s157
      %160 = dma.vmem_to_hbm [thread:$0]  %s156, 128, %s158, [#allocation4]
    $region37: #{tpu_custom_call.1} parent=1 // pred_fallthru
      _
    // Predicated region
    $region38: #{tpu_custom_call.1} parent=1 // pred_check
      _
    $region39: #{tpu_custom_call.1} parent=1 // pred_check_branch
      %162 = sbr.rel (0) target = $region41
    $region40: #{tpu_custom_call.1} parent=1 // pred_region
      %164 = dma.done [#allocation4], 128
    $region41: #{tpu_custom_call.1} parent=1 // pred_fallthru
      _
    %165 = vsyncpa [#allocation3], 1
    %166 = vsyncpa [#allocation6], 1
    %167 = vsyncpa [#allocation4], 1

</llo_original>
